<compile_context>
chip_gen: v7x
topology: tpu7x:2x2x1
jax: 0.10.0
libtpu: 0.0.40
codegen_flags: <defaults>
</compile_context>

<pallas_src>
import jax
import jax.numpy as jnp
import numpy as np
from jax.experimental import pallas as pl
from jax.experimental.pallas import tpu as pltpu

# ---- Module hyper-parameters (fixed by the PyTorch spec: Linear(30, 5)) ----
C = 3        # out_channel
K = 3        # kernel_size
PAD = 1      # conv padding
POOL = 2     # pool size
FC_OUT = 5   # Linear(30, 5)
EPS = 1e-5   # BatchNorm eps
L = 20       # sequence length (C * (L // POOL) == 30 == fc in_features)
LP = L // POOL
REG = L + 2 * PAD          # lane width of one channel's region in the packed layout (22)
P = C * REG                # number of "real" lanes (66)
LW = 128                   # vreg lane width; everything is computed 128 lanes wide

BIAS_LANE = C * REG        # junk lane forced to 1.0 after BN -> carries the fc bias
ROW_WK = 0                 # rows 0..K-1   : per-lane conv taps
ROW_GAMMA = K              # row 3         : per-lane BN gamma
ROW_BETA = K + 1           # row 4         : per-lane BN beta (bias lane = 1.0)
ROW_G = 8                  # rows 8..135   : G = channel-indicator Gram matrix / (B*L)
ROW_W = ROW_G + LW         # rows 136..263 : fc weight (input lane -> out unit), bias on BIAS_LANE
N_ROWS = ROW_W + LW        # 264 rows total (~132 KiB)


def build_constants(params, batch_size):
    """Pack every constant operand into one (N_ROWS, 128) f32 slab.  Init-time only (NumPy)."""
    assert BIAS_LANE + 1 < LW
    inv_n = 1.0 / float(batch_size * L)

    conv_w = np.asarray(params["conv_w"], np.float32)[:, 0, :]   # (C, K)
    gamma = np.asarray(params["bn_gamma"], np.float32)           # (C,)
    beta = np.asarray(params["bn_beta"], np.float32)              # (C,)
    fc_w = np.asarray(params["fc_w"], np.float32)                 # (FC_OUT, 30)
    fc_b = np.asarray(params["fc_b"], np.float32)                 # (FC_OUT,)

    # Channel id of each lane in "y space" (conv-output layout); -1 = junk lane.
    lane_ch = np.full((LW,), -1, np.int64)
    for c in range(C):
        lane_ch[c * REG: c * REG + L] = c
    data = lane_ch >= 0

    consts = np.zeros((N_ROWS, LW), np.float32)

    # Per-lane conv taps: wk[k, c*REG + l] = conv_w[c, k] on data lanes, 0 elsewhere.
    for c in range(C):
        for k in range(K):
            consts[ROW_WK + k, c * REG: c * REG + L] = conv_w[c, k]

    # Per-lane BN affine.  Conv bias intentionally dropped: training-mode BatchNorm subtracts
    # the batch mean, so a per-channel constant cancels exactly and leaves the variance unchanged.
    for c in range(C):
        consts[ROW_GAMMA, c * REG: c * REG + L] = gamma[c]
        consts[ROW_BETA, c * REG: c * REG + L] = beta[c]
    consts[ROW_BETA, BIAS_LANE] = 1.0          # bias lane: y_bn == 1.0 for every batch row

    # G[l1, l2] = 1/(B*L) if l1 and l2 are data lanes of the same channel, else 0.
    # [sum_b y ; sum_b y^2] @ G  ==  per-lane broadcast of [mean ; E[y^2]] per channel.
    same = data[:, None] & data[None, :] & (lane_ch[:, None] == lane_ch[None, :])
    consts[ROW_G: ROW_G + LW, :] = same.astype(np.float32) * inv_n

    # fc weight rearranged to pick up even lanes of each channel region; fc bias on BIAS_LANE.
    for c in range(C):
        for j in range(LP):
            consts[ROW_W + c * REG + 2 * j, :FC_OUT] = fc_w[:, c * LP + j]
    consts[ROW_W + BIAS_LANE, :FC_OUT] = fc_b

    return jnp.asarray(consts)


def cnn_kernel(x_ref, c_ref, out_ref):
    # x_ref  : (B, 128)     VMEM  input; x at lanes [1, L] (lane 0 = left conv pad), zeros elsewhere
    # c_ref  : (N_ROWS, 128) VMEM packed constants (see build_constants)
    # out_ref: (B, 5)       VMEM
    x = x_ref[...]

    # Padded, channel-replicated slab built in registers (no VMEM scratch): region c occupies
    # lanes [c*REG, (c+1)*REG); regions do not overlap so a plain add combines them.
    slab = x + pltpu.roll(x, REG, axis=1) + pltpu.roll(x, 2 * REG, axis=1)

    # Conv1d (cross-correlation) for all 3 channels at once; tap k reads lane p+k.
    # roll by LW-k is a left shift by k; wrapped lanes land where the tap weights are 0.
    y = (c_ref[ROW_WK + 0: ROW_WK + 1, :] * slab
         + c_ref[ROW_WK + 1: ROW_WK + 2, :] * pltpu.roll(slab, LW - 1, axis=1)
         + c_ref[ROW_WK + 2: ROW_WK + 3, :] * pltpu.roll(slab, LW - 2, axis=1))

    # Training-mode BatchNorm1d, one-pass statistics, a single MXU op:
    # [sum_b y ; sum_b y^2] @ G -> per-lane [mean ; E[y^2]] broadcast over each channel.
    st = jnp.concatenate([jnp.sum(y, axis=0, keepdims=True),
                          jnp.sum(y * y, axis=0, keepdims=True)], axis=0)     # (2, 128)
    mv = jnp.dot(st, c_ref[ROW_G: ROW_G + LW, :],
                 preferred_element_type=jnp.float32)                          # (2, 128)
    mean_v = mv[0:1, :]
    var_v = mv[1:2, :] - mean_v * mean_v          # biased variance (junk lanes -> 0)
    inv_std = jax.lax.rsqrt(var_v + EPS)
    scale_v = c_ref[ROW_GAMMA: ROW_GAMMA + 1, :] * inv_std
    shift_v = c_ref[ROW_BETA: ROW_BETA + 1, :] - mean_v * scale_v
    y_bn = y * scale_v + shift_v                  # junk lanes -> 0; BIAS_LANE -> 1.0

    # MaxPool1d(2) + ReLU as a pair-max of adjacent lanes; the fc weight only picks up even
    # in-region lanes (and the bias lane), so odd/junk lanes never contribute.
    r = jnp.maximum(jnp.maximum(y_bn, pltpu.roll(y_bn, LW - 1, axis=1)), 0.0)

    # Linear(30, 5): single (B,128)@(128,128) dot; the fc bias rides on the constant-1 lane.
    res = jnp.dot(r, c_ref[ROW_W: ROW_W + LW, :], preferred_element_type=jnp.float32)
    out_ref[...] = res[:, 0:FC_OUT]


@jax.jit
def cnn_forward(x, consts):
    """x: (B, L) float32; consts: build_constants(params, B) (inv_n is baked in for that B)."""
    B = x.shape[0]
    assert x.shape[1] == L, "Linear(30, 5) requires sequence length 20"
    # Only per-call prep: widen x to the 128-lane layout, data at lanes [PAD, PAD+L).
    x_pad = jnp.zeros((B, LW), jnp.float32).at[:, PAD: PAD + L].set(x.astype(jnp.float32))
    return pl.pallas_call(
        cnn_kernel,
        out_shape=jax.ShapeDtypeStruct((B, FC_OUT), jnp.float32),
        in_specs=[pl.BlockSpec(memory_space=pltpu.MemorySpace.VMEM),
                  pl.BlockSpec(memory_space=pltpu.MemorySpace.VMEM)],
        out_specs=pl.BlockSpec(memory_space=pltpu.MemorySpace.VMEM),
    )(x_pad, consts)


def cnn_ref(x, params):
    """Pure-JAX reference matching the PyTorch forward (training-mode BatchNorm)."""
    B, Lx = x.shape
    xpad = jnp.pad(x, ((0, 0), (PAD, PAD)))
    cw = params["conv_w"][:, 0, :]
    y = jnp.stack(
        [sum(cw[c, k] * xpad[:, k:k + Lx] for k in range(K)) + params["conv_b"][c]
         for c in range(C)], axis=1)                                  # (B, C, L)
    mean = y.mean(axis=(0, 2), keepdims=True)
    var = ((y - mean) ** 2).mean(axis=(0, 2), keepdims=True)
    y = (y - mean) / jnp.sqrt(var + EPS)
    y = y * params["bn_gamma"][None, :, None] + params["bn_beta"][None, :, None]
    pooled = jnp.max(y.reshape(B, C, Lx // POOL, POOL), axis=-1)
    r = jax.nn.relu(pooled)
    flat = r.reshape(B, -1)
    return flat @ params["fc_w"].T + params["fc_b"]


if __name__ == "__main__":
    B = 2
    key = jax.random.PRNGKey(0)
    kx, kw, kb, kfw, kfb = jax.random.split(key, 5)

    x = jax.random.normal(kx, (B, L), jnp.float32)
    params = {
        "conv_w": jax.random.normal(kw, (C, 1, K), jnp.float32) * 0.5,   # Conv1d(1, 3, 3)
        "conv_b": jax.random.normal(kb, (C,), jnp.float32) * 0.1,
        "bn_gamma": jnp.ones((C,), jnp.float32),                         # BatchNorm1d(3) init
        "bn_beta": jnp.zeros((C,), jnp.float32),
        "fc_w": jax.random.normal(kfw, (FC_OUT, 30), jnp.float32) / jnp.sqrt(30.0),
        "fc_b": jax.random.normal(kfb, (FC_OUT,), jnp.float32) * 0.1,
    }

    consts = build_constants(params, B)          # one-time operand prep (NumPy, no per-call XLA)

    out = cnn_forward(x, consts)
    jax.block_until_ready(out)
    assert out.shape == (B, FC_OUT)

    ref = cnn_ref(x, params)
    np.testing.assert_allclose(np.asarray(out), np.asarray(ref), rtol=5e-5, atol=5e-5)

    print("KERNEL_OK")
</pallas_src>

<mosaic_0001>
module attributes {stable_mosaic.version = 11 : i64} {
  func.func @cnn_kernel(%arg0: memref<2x128xf32, #tpu.memory_space<vmem>>, %arg1: memref<264x128xf32, #tpu.memory_space<vmem>>, %arg2: memref<2x5xf32, #tpu.memory_space<vmem>>) attributes {dimension_semantics = [], scalar_prefetch = 0 : i64, scratch_operands = 0 : i64, tpu.core_type = #tpu.core_type<tc>} {
    %c0 = arith.constant 0 : index
    %c0_0 = arith.constant 0 : index
    %0 = vector.load %arg0[%c0, %c0_0] : memref<2x128xf32, #tpu.memory_space<vmem>>, vector<2x128xf32>
    %c22_i32 = arith.constant 22 : i32
    %1 = tpu.dynamic_rotate %0 by %c22_i32 dim 1 : vector<2x128xf32>, i32 -> vector<2x128xf32>
    %2 = arith.addf %0, %1 : vector<2x128xf32>
    %c44_i32 = arith.constant 44 : i32
    %3 = tpu.dynamic_rotate %0 by %c44_i32 dim 1 : vector<2x128xf32>, i32 -> vector<2x128xf32>
    %4 = arith.addf %2, %3 : vector<2x128xf32>
    %c0_1 = arith.constant 0 : index
    %c0_2 = arith.constant 0 : index
    %5 = vector.load %arg1[%c0_1, %c0_2] : memref<264x128xf32, #tpu.memory_space<vmem>>, vector<1x128xf32>
    %6 = vector.broadcast %5 : vector<1x128xf32> to vector<2x128xf32>
    %7 = arith.mulf %6, %4 : vector<2x128xf32>
    %c1 = arith.constant 1 : index
    %c0_3 = arith.constant 0 : index
    %8 = vector.load %arg1[%c1, %c0_3] : memref<264x128xf32, #tpu.memory_space<vmem>>, vector<1x128xf32>
    %c127_i32 = arith.constant 127 : i32
    %9 = tpu.dynamic_rotate %4 by %c127_i32 dim 1 : vector<2x128xf32>, i32 -> vector<2x128xf32>
    %10 = vector.broadcast %8 : vector<1x128xf32> to vector<2x128xf32>
    %11 = arith.mulf %10, %9 : vector<2x128xf32>
    %12 = arith.addf %7, %11 : vector<2x128xf32>
    %c2 = arith.constant 2 : index
    %c0_4 = arith.constant 0 : index
    %13 = vector.load %arg1[%c2, %c0_4] : memref<264x128xf32, #tpu.memory_space<vmem>>, vector<1x128xf32>
    %c126_i32 = arith.constant 126 : i32
    %14 = tpu.dynamic_rotate %4 by %c126_i32 dim 1 : vector<2x128xf32>, i32 -> vector<2x128xf32>
    %15 = vector.broadcast %13 : vector<1x128xf32> to vector<2x128xf32>
    %16 = arith.mulf %15, %14 : vector<2x128xf32>
    %17 = arith.addf %12, %16 : vector<2x128xf32>
    %cst = arith.constant dense<0.000000e+00> : vector<128xf32>
    %18 = vector.multi_reduction <add>, %17, %cst [0] : vector<2x128xf32> to vector<128xf32>
    %19 = vector.shape_cast %18 : vector<128xf32> to vector<1x128xf32>
    %20 = arith.mulf %17, %17 : vector<2x128xf32>
    %cst_5 = arith.constant dense<0.000000e+00> : vector<128xf32>
    %21 = vector.multi_reduction <add>, %20, %cst_5 [0] : vector<2x128xf32> to vector<128xf32>
    %22 = vector.shape_cast %21 : vector<128xf32> to vector<1x128xf32>
    %23 = tpu.concatenate %19, %22 in 0 : vector<1x128xf32>, vector<1x128xf32> -> vector<2x128xf32>
    %c8 = arith.constant 8 : index
    %c0_6 = arith.constant 0 : index
    %24 = vector.load %arg1[%c8, %c0_6] : memref<264x128xf32, #tpu.memory_space<vmem>>, vector<128x128xf32>
    %cst_7 = arith.constant dense<0.000000e+00> : vector<2x128xf32>
    %25 = tpu.matmul %23, %24, %cst_7 {dimension_numbers = #tpu.dot_dimension_numbers<[1], [0], [0], [1], [0, 0, 1, 1], [], []>} : vector<2x128xf32>, vector<128x128xf32>, vector<2x128xf32> -> vector<2x128xf32>
    %26 = vector.extract_strided_slice %25 {offsets = [0, 0], sizes = [1, 128], strides = [1, 1]} : vector<2x128xf32> to vector<1x128xf32>
    %27 = vector.extract_strided_slice %25 {offsets = [1, 0], sizes = [1, 128], strides = [1, 1]} : vector<2x128xf32> to vector<1x128xf32>
    %28 = arith.mulf %26, %26 : vector<1x128xf32>
    %29 = arith.subf %27, %28 : vector<1x128xf32>
    %cst_8 = arith.constant 9.99999974E-6 : f32
    %30 = vector.broadcast %cst_8 : f32 to vector<1x128xf32>
    %31 = arith.addf %29, %30 : vector<1x128xf32>
    %32 = math.rsqrt %31 : vector<1x128xf32>
    %c3 = arith.constant 3 : index
    %c0_9 = arith.constant 0 : index
    %33 = vector.load %arg1[%c3, %c0_9] : memref<264x128xf32, #tpu.memory_space<vmem>>, vector<1x128xf32>
    %34 = arith.mulf %33, %32 : vector<1x128xf32>
    %c4 = arith.constant 4 : index
    %c0_10 = arith.constant 0 : index
    %35 = vector.load %arg1[%c4, %c0_10] : memref<264x128xf32, #tpu.memory_space<vmem>>, vector<1x128xf32>
    %36 = arith.mulf %26, %34 : vector<1x128xf32>
    %37 = arith.subf %35, %36 : vector<1x128xf32>
    %38 = vector.broadcast %34 : vector<1x128xf32> to vector<2x128xf32>
    %39 = arith.mulf %17, %38 : vector<2x128xf32>
    %40 = vector.broadcast %37 : vector<1x128xf32> to vector<2x128xf32>
    %41 = arith.addf %39, %40 : vector<2x128xf32>
    %c127_i32_11 = arith.constant 127 : i32
    %42 = tpu.dynamic_rotate %41 by %c127_i32_11 dim 1 : vector<2x128xf32>, i32 -> vector<2x128xf32>
    %43 = arith.maximumf %41, %42 : vector<2x128xf32>
    %cst_12 = arith.constant 0.000000e+00 : f32
    %44 = vector.broadcast %cst_12 : f32 to vector<2x128xf32>
    %45 = arith.maximumf %43, %44 : vector<2x128xf32>
    %c136 = arith.constant 136 : index
    %c0_13 = arith.constant 0 : index
    %46 = vector.load %arg1[%c136, %c0_13] : memref<264x128xf32, #tpu.memory_space<vmem>>, vector<128x128xf32>
    %cst_14 = arith.constant dense<0.000000e+00> : vector<2x128xf32>
    %47 = tpu.matmul %45, %46, %cst_14 {dimension_numbers = #tpu.dot_dimension_numbers<[1], [0], [0], [1], [0, 0, 1, 1], [], []>} : vector<2x128xf32>, vector<128x128xf32>, vector<2x128xf32> -> vector<2x128xf32>
    %48 = vector.extract_strided_slice %47 {offsets = [0, 0], sizes = [2, 5], strides = [1, 1]} : vector<2x128xf32> to vector<2x5xf32>
    %c0_15 = arith.constant 0 : index
    %c0_16 = arith.constant 0 : index
    %49 = vector.load %arg2[%c0_15, %c0_16] : memref<2x5xf32, #tpu.memory_space<vmem>>, vector<2x5xf32>
    tpu.vector_store %arg2[%c0_15, %c0_16], %48 {strides = array<i32>} : memref<2x5xf32, #tpu.memory_space<vmem>>, vector<2x5xf32>,
    return
  }
}

</mosaic_0001>

<llo_original>
// kernel: cnn_forward.1
$region0: #{cnn_forward.1}
  #allocation0 [shape = 'u32[]', space=smem, size = 0x4, offset = 0x4, fixed_abs, tag = 'smem constant byte address 0x4 - core index']
  #allocation1 [shape = 'u32[144,128]{1,0:T(1,128)}', space=vmem, size = 0x12000, scoped, tag = 'internal scratch']
  %s0 = inlined_call_operand.vmem [shape: f32[2,128], index: 0, kind: input, shape index: {}]
  %s1 = inlined_call_operand.hbm [shape: f32[264,128], index: 1, kind: input, shape index: {}]
  %s2 = inlined_call_operand.hbm [shape: f32[2,5], index: 2, kind: output, shape index: {}]
  %s3 = sld [smem:[#allocation0]]
  $region22: #{cnn_forward.1} parent=0
    _
  %s5 = ssub.s32 1, %s3
  %s6 = scalar_select 0, %s5, %s3
  $region1: #{cnn_forward.1} parent=0
    #allocation2 [shape = 'u8[135168]{0}', space=vmem, size = 0x21000, scoped, tag = 'input window, operand 1, single buffered']
    #allocation3 [shape = 's32[1]{0}', space=sflag, size = 0x4, scoped, tag = 'scoped memory for cnn_forward.1']
    #allocation4 [shape = 's32[1]{0}', space=sflag, size = 0x4, scoped, tag = 'scoped memory for cnn_forward.1']
    #allocation5 [shape = 'u8[1024]{0}', space=vmem, size = 0x400, scoped, tag = 'output window, operand 0, single buffered']
    %7 = vsyncpa [#allocation3], 0
    %8 = vsyncpa [#allocation4], 0
    // Predicated region
    $region2: #{cnn_forward.1} parent=1 // pred_check
      _
    $region3: #{cnn_forward.1} parent=1 // pred_check_branch
      %10 = sbr.rel (0) target = $region5
    $region4: #{cnn_forward.1} parent=1 // pred_region
      _
    $region5: #{cnn_forward.1} parent=1 // pred_fallthru
      _
    // Predicated region
    $region6: #{cnn_forward.1} parent=1 // pred_check
      _
    $region7: #{cnn_forward.1} parent=1 // pred_check_branch
      %12 = sbr.rel (0) target = $region9
    $region8: #{cnn_forward.1} parent=1 // pred_region
      %s14 = ssub.s32 4224, 4224
      %15 = vsyncadd [#allocation3], %s14
      %s16 = sshll.u32 [#allocation2], 4
      %s17 = int_to_ptr.vmem [resolvable:$true] %s16
      %22 = dma.hbm_to_vmem [thread:$0]  %s1, 4224, %s17, [#allocation3], 128, 128, 8
    $region9: #{cnn_forward.1} parent=1 // pred_fallthru
      _
    // Predicated region
    $region10: #{cnn_forward.1} parent=1 // pred_check
      _
    $region11: #{cnn_forward.1} parent=1 // pred_check_branch
      %24 = sbr.rel (0) target = $region13
    $region12: #{cnn_forward.1} parent=1 // pred_region
      %25 = dma.done [#allocation3], 4224
    $region13: #{cnn_forward.1} parent=1 // pred_fallthru
      _
    %v26 = vld [vmem:[%s0] sm:$0x3]
    %27 = vrot.lane.b32.xlu0 %v26, 22
    %v28 = vpop.permute.xlu0 %27
    %v29 = vadd.f32 %v26, %v28
    %30 = vrot.lane.b32.xlu0 %v26, 44
    %v31 = vpop.permute.xlu0 %30
    %v32 = vadd.f32 %v29, %v31
    %v33 = vld [vmem:[#allocation2] sm:$0x1]
    %v34 = vlaneseq
    %v35 = vshrl.u32 %v34, 7
    %v36 = vsub.s32 0, %v35
    %v37 = vrot.slane %v33, %v36
    %v38 = vmul.f32 %v37, %v32
    %v39 = vld [vmem:[#allocation2 + $0x1] sm:$0x1]
    %40 = vrot.lane.b32.xlu0 %v32, 127
    %v41 = vpop.permute.xlu0 %40
    %v42 = vlaneseq
    %v43 = vshrl.u32 %v42, 7
    %v44 = vsub.s32 0, %v43
    %v45 = vrot.slane %v39, %v44
    %v46 = vmul.f32 %v45, %v41
    %v47 = vadd.f32 %v38, %v46
    %v48 = vld [vmem:[#allocation2 + $0x2] sm:$0x1]
    %49 = vrot.lane.b32.xlu0 %v32, 126
    %v50 = vpop.permute.xlu0 %49
    %v51 = vlaneseq
    %v52 = vshrl.u32 %v51, 7
    %v53 = vsub.s32 0, %v52
    %v54 = vrot.slane %v48, %v53
    %v55 = vmul.f32 %v54, %v50
    %v56 = vadd.f32 %v47, %v55
    %vm57 = vcmask 1041408
    %v58 = vsel %vm57, %v56, 0.0
    %v59 = vrot.slane %v58, 4
    %v60 = vadd.f32 %v58, %v59
    %v61 = vrot.slane %v60, 2
    %v62 = vadd.f32 %v60, %v61
    %v63 = vrot.slane %v62, 1
    %v64 = vadd.f32 %v62, %v63
    %v65 = vmul.f32 %v56, %v56
    %v66 = vsel %vm57, %v65, 0.0
    %v67 = vrot.slane %v66, 4
    %v68 = vadd.f32 %v66, %v67
    %v69 = vrot.slane %v68, 2
    %v70 = vadd.f32 %v68, %v69
    %v71 = vrot.slane %v70, 1
    %v72 = vadd.f32 %v70, %v71
    %vm73 = vcmask 1040384
    %v74 = vsel %vm73, %v64, %v72
    %v75 = vld [vmem:[#allocation2 + $0x8] sm:$0xff]
    %v76 = vld [vmem:[#allocation2 + $0x10] sm:$0xff]
    %v77 = vld [vmem:[#allocation2 + $0x18] sm:$0xff]
    %v78 = vld [vmem:[#allocation2 + $0x20] sm:$0xff]
    %v79 = vld [vmem:[#allocation2 + $0x28] sm:$0xff]
    %v80 = vld [vmem:[#allocation2 + $0x30] sm:$0xff]
    %v81 = vld [vmem:[#allocation2 + $0x38] sm:$0xff]
    %v82 = vld [vmem:[#allocation2 + $0x40] sm:$0xff]
    %v83 = vld [vmem:[#allocation2 + $0x48] sm:$0xff]
    %v84 = vld [vmem:[#allocation2 + $0x50] sm:$0xff]
    %v85 = vld [vmem:[#allocation2 + $0x58] sm:$0xff]
    %v86 = vld [vmem:[#allocation2 + $0x60] sm:$0xff]
    %v87 = vld [vmem:[#allocation2 + $0x68] sm:$0xff]
    %v88 = vld [vmem:[#allocation2 + $0x70] sm:$0xff]
    %v89 = vld [vmem:[#allocation2 + $0x78] sm:$0xff]
    %v90 = vld [vmem:[#allocation2 + $0x80] sm:$0xff]
    %91 = vmatprep.subr.mxu0 0.0
    %92 = vmatpush1.msra.mxu0 %v75
    %93 = vmatprep.subr.mxu0 0.0
    %94 = vmatpush1.msra.mxu0 %v76
    %95 = vmatprep.subr.mxu0 0.0
    %96 = vmatpush1.msra.mxu0 %v77
    %97 = vmatprep.subr.mxu0 0.0
    %98 = vmatpush1.msra.mxu0 %v78
    %99 = vmatprep.subr.mxu0 0.0
    %100 = vmatpush1.msra.mxu0 %v79
    %101 = vmatprep.subr.mxu0 0.0
    %102 = vmatpush1.msra.mxu0 %v80
    %103 = vmatprep.subr.mxu0 0.0
    %104 = vmatpush1.msra.mxu0 %v81
    %105 = vmatprep.subr.mxu0 0.0
    %106 = vmatpush1.msra.mxu0 %v82
    %107 = vmatprep.subr.mxu0 0.0
    %108 = vmatpush1.msra.mxu0 %v83
    %109 = vmatprep.subr.mxu0 0.0
    %110 = vmatpush1.msra.mxu0 %v84
    %111 = vmatprep.subr.mxu0 0.0
    %112 = vmatpush1.msra.mxu0 %v85
    %113 = vmatprep.subr.mxu0 0.0
    %114 = vmatpush1.msra.mxu0 %v86
    %115 = vmatprep.subr.mxu0 0.0
    %116 = vmatpush1.msra.mxu0 %v87
    %117 = vmatprep.subr.mxu0 0.0
    %118 = vmatpush1.msra.mxu0 %v88
    %119 = vmatprep.subr.mxu0 0.0
    %120 = vmatpush1.msra.mxu0 %v89
    %121 = vmatprep.subr.mxu0 0.0
    %122 = vmatpush1.msra.mxu0 %v90
    %123 = vmatprep.subr.mxu0 0.0
    %124 = vmatpush1.msra.mxu0 0.0
    %125 = vmatprep.subr.mxu0 0.0
    %126 = vmatpush1.msra.mxu0 0.0
    %127 = vmatprep.subr.mxu0 0.0
    %128 = vmatpush1.msra.mxu0 0.0
    %129 = vmatprep.subr.mxu0 0.0
    %130 = vmatpush1.msra.mxu0 0.0
    %131 = vmatprep.subr.mxu0 0.0
    %132 = vmatpush1.msra.mxu0 0.0
    %133 = vmatprep.subr.mxu0 0.0
    %134 = vmatpush1.msra.mxu0 0.0
    %135 = vmatprep.subr.mxu0 0.0
    %136 = vmatpush1.msra.mxu0 0.0
    %137 = vmatprep.subr.mxu0 0.0
    %138 = vmatpush1.msra.mxu0 0.0
    %139 = vmatprep.subr.mxu0 0.0
    %140 = vmatpush1.msra.mxu0 0.0
    %141 = vmatprep.subr.mxu0 0.0
    %142 = vmatpush1.msra.mxu0 0.0
    %143 = vmatprep.subr.mxu0 0.0
    %144 = vmatpush1.msra.mxu0 0.0
    %145 = vmatprep.subr.mxu0 0.0
    %146 = vmatpush1.msra.mxu0 0.0
    %147 = vmatprep.subr.mxu0 0.0
    %148 = vmatpush1.msra.mxu0 0.0
    %149 = vmatprep.subr.mxu0 0.0
    %150 = vmatpush1.msra.mxu0 0.0
    %151 = vmatprep.subr.mxu0 0.0
    %152 = vmatpush1.msra.mxu0 0.0
    %153 = vmatprep.subr.mxu0 0.0
    %154 = vmatpush1.msra.mxu0 0.0
    %155 = vmatprep.mubr.f32.mxu0 0.0
    %156 = vmatmul.mubr.f32.gmra.mrb[0].mxu0 %v74
    %v157 = vpop.f32.mrb[0].mxu0
    %v158 = vadd.f32 0.0, %v157
    %v159 = vpop.f32.mrb[0].mxu0
    %160 = vdwg.mxu0
    %v161 = vmul.f32 %v158, %v158
    %v163 = vrot.slane %v161, 7
    %v165 = vsub.f32 %v158, %v163
    %v166 = vadd.f32 %v165, 1e-05
    %v167 = vrsqrt.pop %v166
    %v168 = vld [vmem:[#allocation2 + $0x3] sm:$0x1]
    %v170 = vrot.slane %v167, 1
    %v172 = vmul.f32 %v168, %v170
    %v173 = vld [vmem:[#allocation2 + $0x4] sm:$0x1]
    %v174 = vmul.f32 %v158, %v172
    %v175 = vsub.f32 %v173, %v174
    %v176 = vlaneseq
    %v177 = vshrl.u32 %v176, 7
    %v178 = vsub.s32 0, %v177
    %v179 = vrot.slane %v172, %v178
    %v180 = vmul.f32 %v56, %v179
    %v181 = vlaneseq
    %v182 = vshrl.u32 %v181, 7
    %v183 = vsub.s32 0, %v182
    %v184 = vrot.slane %v175, %v183
    %v185 = vadd.f32 %v180, %v184
    %186 = vrot.lane.b32.xlu0 %v185, 127
    %v187 = vpop.permute.xlu0 %186
    %v188 = vmax.f32 %v185, %v187
    %v189 = vmax.f32 %v188, 0.0
    %v190 = vld [vmem:[#allocation2 + $0x88] sm:$0xff]
    %v191 = vld [vmem:[#allocation2 + $0x90] sm:$0xff]
    %v192 = vld [vmem:[#allocation2 + $0x98] sm:$0xff]
    %v193 = vld [vmem:[#allocation2 + $0xa0] sm:$0xff]
    %v194 = vld [vmem:[#allocation2 + $0xa8] sm:$0xff]
    %v195 = vld [vmem:[#allocation2 + $0xb0] sm:$0xff]
    %v196 = vld [vmem:[#allocation2 + $0xb8] sm:$0xff]
    %v197 = vld [vmem:[#allocation2 + $0xc0] sm:$0xff]
    %v198 = vld [vmem:[#allocation2 + $0xc8] sm:$0xff]
    %v199 = vld [vmem:[#allocation2 + $0xd0] sm:$0xff]
    %v200 = vld [vmem:[#allocation2 + $0xd8] sm:$0xff]
    %v201 = vld [vmem:[#allocation2 + $0xe0] sm:$0xff]
    %v202 = vld [vmem:[#allocation2 + $0xe8] sm:$0xff]
    %v203 = vld [vmem:[#allocation2 + $0xf0] sm:$0xff]
    %v204 = vld [vmem:[#allocation2 + $0xf8] sm:$0xff]
    %v205 = vld [vmem:[#allocation2 + $0x100] sm:$0xff]
    %206 = vmatprep.subr.mxu0 0.0
    %207 = vmatpush1.msra.mxu0 %v190
    %208 = vmatprep.subr.mxu0 0.0
    %209 = vmatpush1.msra.mxu0 %v191
    %210 = vmatprep.subr.mxu0 0.0
    %211 = vmatpush1.msra.mxu0 %v192
    %212 = vmatprep.subr.mxu0 0.0
    %213 = vmatpush1.msra.mxu0 %v193
    %214 = vmatprep.subr.mxu0 0.0
    %215 = vmatpush1.msra.mxu0 %v194
    %216 = vmatprep.subr.mxu0 0.0
    %217 = vmatpush1.msra.mxu0 %v195
    %218 = vmatprep.subr.mxu0 0.0
    %219 = vmatpush1.msra.mxu0 %v196
    %220 = vmatprep.subr.mxu0 0.0
    %221 = vmatpush1.msra.mxu0 %v197
    %222 = vmatprep.subr.mxu0 0.0
    %223 = vmatpush1.msra.mxu0 %v198
    %224 = vmatprep.subr.mxu0 0.0
    %225 = vmatpush1.msra.mxu0 %v199
    %226 = vmatprep.subr.mxu0 0.0
    %227 = vmatpush1.msra.mxu0 %v200
    %228 = vmatprep.subr.mxu0 0.0
    %229 = vmatpush1.msra.mxu0 %v201
    %230 = vmatprep.subr.mxu0 0.0
    %231 = vmatpush1.msra.mxu0 %v202
    %232 = vmatprep.subr.mxu0 0.0
    %233 = vmatpush1.msra.mxu0 %v203
    %234 = vmatprep.subr.mxu0 0.0
    %235 = vmatpush1.msra.mxu0 %v204
    %236 = vmatprep.subr.mxu0 0.0
    %237 = vmatpush1.msra.mxu0 %v205
    %238 = vmatprep.subr.mxu0 0.0
    %239 = vmatpush1.msra.mxu0 0.0
    %240 = vmatprep.subr.mxu0 0.0
    %241 = vmatpush1.msra.mxu0 0.0
    %242 = vmatprep.subr.mxu0 0.0
    %243 = vmatpush1.msra.mxu0 0.0
    %244 = vmatprep.subr.mxu0 0.0
    %245 = vmatpush1.msra.mxu0 0.0
    %246 = vmatprep.subr.mxu0 0.0
    %247 = vmatpush1.msra.mxu0 0.0
    %248 = vmatprep.subr.mxu0 0.0
    %249 = vmatpush1.msra.mxu0 0.0
    %250 = vmatprep.subr.mxu0 0.0
    %251 = vmatpush1.msra.mxu0 0.0
    %252 = vmatprep.subr.mxu0 0.0
    %253 = vmatpush1.msra.mxu0 0.0
    %254 = vmatprep.subr.mxu0 0.0
    %255 = vmatpush1.msra.mxu0 0.0
    %256 = vmatprep.subr.mxu0 0.0
    %257 = vmatpush1.msra.mxu0 0.0
    %258 = vmatprep.subr.mxu0 0.0
    %259 = vmatpush1.msra.mxu0 0.0
    %260 = vmatprep.subr.mxu0 0.0
    %261 = vmatpush1.msra.mxu0 0.0
    %262 = vmatprep.subr.mxu0 0.0
    %263 = vmatpush1.msra.mxu0 0.0
    %264 = vmatprep.subr.mxu0 0.0
    %265 = vmatpush1.msra.mxu0 0.0
    %266 = vmatprep.subr.mxu0 0.0
    %267 = vmatpush1.msra.mxu0 0.0
    %268 = vmatprep.subr.mxu0 0.0
    %269 = vmatpush1.msra.mxu0 0.0
    %270 = vmatprep.mubr.f32.mxu0 0.0
    %271 = vmatmul.mubr.f32.gmra.mrb[0].mxu0 %v189
    %v272 = vpop.f32.mrb[0].mxu0
    %v273 = vadd.f32 0.0, %v272
    %v274 = vpop.f32.mrb[0].mxu0
    %275 = vdwg.mxu0
    %vm276 = vcmask 33792
    %277 = vst.msk [vmem:[#allocation5] sm:$0x3] %vm276, %v273
    // Predicated region
    $region14: #{cnn_forward.1} parent=1 // pred_check
      _
    $region15: #{cnn_forward.1} parent=1 // pred_check_branch
      %279 = sbr.rel (0) target = $region17
    $region16: #{cnn_forward.1} parent=1 // pred_region
      %s281 = ssub.s32 32, 32
      %282 = vsyncadd [#allocation4], %s281
      %s284 = sshll.u32 [#allocation5], 4
      %s285 = int_to_ptr.vmem [resolvable:$true] %s284
      %287 = dma.vmem_to_hbm [thread:$0]  %s285, 32, %s2, [#allocation4]
    $region17: #{cnn_forward.1} parent=1 // pred_fallthru
      _
    // Predicated region
    $region18: #{cnn_forward.1} parent=1 // pred_check
      _
    $region19: #{cnn_forward.1} parent=1 // pred_check_branch
      %289 = sbr.rel (0) target = $region21
    $region20: #{cnn_forward.1} parent=1 // pred_region
      %290 = dma.done [#allocation4], 32
    $region21: #{cnn_forward.1} parent=1 // pred_fallthru
      _
    %291 = vsyncpa [#allocation3], 1
    %292 = vsyncpa [#allocation4], 1

</llo_original>
